<compile_context>
chip_gen: v7x
topology: tpu7x:2x2x1
jax: 0.10.0
libtpu: 0.0.40
codegen_flags: <defaults>
</compile_context>

<pallas_src>
import functools

import jax
import jax.numpy as jnp
from jax.experimental import pallas as pl
from jax.experimental.pallas import tpu as pltpu

ENCODED_DIM = 10
OUTPUT_DIM = 32          # small synthetic output dimension
HIDDEN = (64, 128, 256)
LANE = 128
SUBLANE = 8
NEG_INF = -1e30          # bias for padded logit columns -> exp() == 0


def _round_up(n, m):
    return ((n + m - 1) // m) * m


def decoder_kernel(x_ref,
                   w1_ref, b1_ref,
                   w2_ref, b2_ref,
                   w3_ref, b3_ref,
                   w4_ref, b4_ref,
                   o_ref):
    # fc1 + relu (bf16 MXU operands, f32 accumulation / epilogue)
    h = jnp.dot(x_ref[...].astype(jnp.bfloat16), w1_ref[...],
                preferred_element_type=jnp.float32)
    h = jnp.maximum(h + b1_ref[...], 0.0)
    # fc2 + relu
    h = jnp.dot(h.astype(jnp.bfloat16), w2_ref[...],
                preferred_element_type=jnp.float32)
    h = jnp.maximum(h + b2_ref[...], 0.0)
    # fc3 + relu
    h = jnp.dot(h.astype(jnp.bfloat16), w3_ref[...],
                preferred_element_type=jnp.float32)
    h = jnp.maximum(h + b3_ref[...], 0.0)
    # fc4 (no activation); padded output columns carry a -1e30 bias so they
    # contribute nothing to the softmax and the store stays lane-dense.
    logits = jnp.dot(h.astype(jnp.bfloat16), w4_ref[...],
                     preferred_element_type=jnp.float32)
    logits = logits + b4_ref[...]
    # numerically stable softmax along the last dim
    m = jnp.max(logits, axis=-1, keepdims=True)
    e = jnp.exp(logits - m)
    denom = jnp.sum(e, axis=-1, keepdims=True)
    o_ref[...] = (e * pl.reciprocal(denom, approx=True)).astype(o_ref.dtype)


def prepare_kernel_params(params):
    """Convert f32 (w, b) pairs -> bf16 weights + (1, dim) f32 biases.

    The last layer is padded to a multiple of 128 output columns (zero weight
    columns, -1e30 bias) so the kernel's output block is lane-dense.
    """
    (w1, b1), (w2, b2), (w3, b3), (w4, b4) = params
    out_dim = w4.shape[1]
    out_pad = _round_up(out_dim, LANE)
    w4p = jnp.zeros((w4.shape[0], out_pad), jnp.float32).at[:, :out_dim].set(w4)
    b4p = jnp.full((out_pad,), NEG_INF, jnp.float32).at[:out_dim].set(
        b4.reshape(-1))

    def prep(w, b):
        return w.astype(jnp.bfloat16), b.reshape(1, -1).astype(jnp.float32)

    kparams = (prep(w1, b1), prep(w2, b2), prep(w3, b3), prep(w4p, b4p))
    return kparams, out_dim


@functools.partial(jax.jit, static_argnames=("out_dim", "tile_b"))
def decoder_forward(x, kparams, out_dim, tile_b=512):
    (w1, b1), (w2, b2), (w3, b3), (w4, b4) = kparams
    B, d_in = x.shape
    out_pad = w4.shape[1]

    # Batch tile: multiple of 8 sublanes, capped by tile_b (keeps the VMEM
    # footprint modest even on v7x's 64 MiB); pad the batch so the grid
    # divides evenly.
    tile_b = min(tile_b, _round_up(B, SUBLANE))
    b_pad = _round_up(B, tile_b)
    if b_pad != B:
        x = jnp.pad(x, ((0, b_pad - B), (0, 0)))
    grid = (b_pad // tile_b,)

    def const(i):          # parameters: same block every step -> resident
        return (0, 0)

    out = pl.pallas_call(
        decoder_kernel,
        out_shape=jax.ShapeDtypeStruct((b_pad, out_pad), jnp.float32),
        grid=grid,
        in_specs=[
            pl.BlockSpec((tile_b, d_in), lambda i: (i, 0)),
            pl.BlockSpec(w1.shape, const), pl.BlockSpec(b1.shape, const),
            pl.BlockSpec(w2.shape, const), pl.BlockSpec(b2.shape, const),
            pl.BlockSpec(w3.shape, const), pl.BlockSpec(b3.shape, const),
            pl.BlockSpec(w4.shape, const), pl.BlockSpec(b4.shape, const),
        ],
        out_specs=pl.BlockSpec((tile_b, out_pad), lambda i: (i, 0)),
        compiler_params=pltpu.CompilerParams(
            dimension_semantics=("parallel",)),
    )(x, w1, b1, w2, b2, w3, b3, w4, b4)

    return out[:B, :out_dim]


def init_linear(key, in_dim, out_dim):
    # PyTorch nn.Linear default init: U(-1/sqrt(in), 1/sqrt(in)) for W and b.
    kw, kb = jax.random.split(key)
    bound = 1.0 / jnp.sqrt(jnp.float32(in_dim))
    w = jax.random.uniform(kw, (in_dim, out_dim), jnp.float32, -bound, bound)
    b = jax.random.uniform(kb, (1, out_dim), jnp.float32, -bound, bound)
    return w, b


def init_decoder_params(key, encoded_dim, output_dim):
    dims = (encoded_dim,) + HIDDEN + (output_dim,)
    keys = jax.random.split(key, len(dims) - 1)
    return [init_linear(k, dims[i], dims[i + 1]) for i, k in enumerate(keys)]


def reference_forward(x, params):
    h = x
    for i, (w, b) in enumerate(params):
        h = h @ w + b
        if i < len(params) - 1:
            h = jnp.maximum(h, 0.0)
    return jax.nn.softmax(h, axis=-1)


if __name__ == "__main__":
    key = jax.random.PRNGKey(0)
    k_params, k_x1, k_x2 = jax.random.split(key, 3)

    params = init_decoder_params(k_params, ENCODED_DIM, OUTPUT_DIM)
    kparams, out_dim = prepare_kernel_params(params)

    # Small case (single grid step).
    batch = 8
    x = jax.random.normal(k_x1, (batch, ENCODED_DIM), jnp.float32)
    out = jax.block_until_ready(decoder_forward(x, kparams, out_dim))
    ref = reference_forward(x, params)
    assert out.shape == (batch, OUTPUT_DIM)
    assert jnp.allclose(out, ref, atol=3e-3, rtol=2e-2)
    assert jnp.allclose(jnp.sum(out, axis=-1), 1.0, atol=3e-3)

    # Larger case exercising the batch grid + remainder padding (B=200,
    # tile_b=128 -> 2 grid steps with 56 padded rows).
    batch2 = 200
    x2 = jax.random.normal(k_x2, (batch2, ENCODED_DIM), jnp.float32)
    out2 = jax.block_until_ready(decoder_forward(x2, kparams, out_dim,
                                                 tile_b=128))
    ref2 = reference_forward(x2, params)
    assert out2.shape == (batch2, OUTPUT_DIM)
    assert jnp.allclose(out2, ref2, atol=3e-3, rtol=2e-2)
    assert jnp.allclose(jnp.sum(out2, axis=-1), 1.0, atol=3e-3)

    print("KERNEL_OK")
</pallas_src>

<mosaic_0001>
module attributes {stable_mosaic.version = 11 : i64} {
  func.func @decoder_kernel(%arg0: i32, %arg1: memref<8x10xf32, #tpu.memory_space<vmem>>, %arg2: memref<10x64xbf16, #tpu.memory_space<vmem>>, %arg3: memref<1x64xf32, #tpu.memory_space<vmem>>, %arg4: memref<64x128xbf16, #tpu.memory_space<vmem>>, %arg5: memref<1x128xf32, #tpu.memory_space<vmem>>, %arg6: memref<128x256xbf16, #tpu.memory_space<vmem>>, %arg7: memref<1x256xf32, #tpu.memory_space<vmem>>, %arg8: memref<256x128xbf16, #tpu.memory_space<vmem>>, %arg9: memref<1x128xf32, #tpu.memory_space<vmem>>, %arg10: memref<8x128xf32, #tpu.memory_space<vmem>>) attributes {dimension_semantics = [#tpu.dimension_semantics<parallel>], iteration_bounds = array<i64: 1>, scalar_prefetch = 0 : i64, scratch_operands = 0 : i64, tpu.core_type = #tpu.core_type<tc>, window_params = [{transform_indices = @transform_0, window_bounds = array<i64: 8, 10>}, {pipeline_mode = #tpu.pipeline_mode<synchronous>, transform_indices = @transform_1, window_bounds = array<i64: 10, 64>}, {pipeline_mode = #tpu.pipeline_mode<synchronous>, transform_indices = @transform_2, window_bounds = array<i64: 1, 64>}, {pipeline_mode = #tpu.pipeline_mode<synchronous>, transform_indices = @transform_3, window_bounds = array<i64: 64, 128>}, {pipeline_mode = #tpu.pipeline_mode<synchronous>, transform_indices = @transform_4, window_bounds = array<i64: 1, 128>}, {pipeline_mode = #tpu.pipeline_mode<synchronous>, transform_indices = @transform_5, window_bounds = array<i64: 128, 256>}, {pipeline_mode = #tpu.pipeline_mode<synchronous>, transform_indices = @transform_6, window_bounds = array<i64: 1, 256>}, {pipeline_mode = #tpu.pipeline_mode<synchronous>, transform_indices = @transform_7, window_bounds = array<i64: 256, 128>}, {pipeline_mode = #tpu.pipeline_mode<synchronous>, transform_indices = @transform_8, window_bounds = array<i64: 1, 128>}, {transform_indices = @transform_9, window_bounds = array<i64: 8, 128>}]} {
    %c0 = arith.constant 0 : index
    %c0_0 = arith.constant 0 : index
    %0 = vector.load %arg1[%c0, %c0_0] : memref<8x10xf32, #tpu.memory_space<vmem>>, vector<8x10xf32>
    %1 = arith.truncf %0 : vector<8x10xf32> to vector<8x10xbf16>
    %c0_1 = arith.constant 0 : index
    %c0_2 = arith.constant 0 : index
    %2 = vector.load %arg2[%c0_1, %c0_2] : memref<10x64xbf16, #tpu.memory_space<vmem>>, vector<10x64xbf16>
    %cst = arith.constant dense<0.000000e+00> : vector<8x64xf32>
    %3 = tpu.matmul %1, %2, %cst {dimension_numbers = #tpu.dot_dimension_numbers<[1], [0], [0], [1], [0, 0, 1, 1], [], []>} : vector<8x10xbf16>, vector<10x64xbf16>, vector<8x64xf32> -> vector<8x64xf32>
    %c0_3 = arith.constant 0 : index
    %c0_4 = arith.constant 0 : index
    %4 = vector.load %arg3[%c0_3, %c0_4] : memref<1x64xf32, #tpu.memory_space<vmem>>, vector<1x64xf32>
    %5 = vector.broadcast %4 : vector<1x64xf32> to vector<8x64xf32>
    %6 = arith.addf %3, %5 : vector<8x64xf32>
    %cst_5 = arith.constant 0.000000e+00 : f32
    %7 = vector.broadcast %cst_5 : f32 to vector<8x64xf32>
    %8 = arith.maximumf %6, %7 : vector<8x64xf32>
    %9 = arith.truncf %8 : vector<8x64xf32> to vector<8x64xbf16>
    %c0_6 = arith.constant 0 : index
    %c0_7 = arith.constant 0 : index
    %10 = vector.load %arg4[%c0_6, %c0_7] : memref<64x128xbf16, #tpu.memory_space<vmem>>, vector<64x128xbf16>
    %cst_8 = arith.constant dense<0.000000e+00> : vector<8x128xf32>
    %11 = tpu.matmul %9, %10, %cst_8 {dimension_numbers = #tpu.dot_dimension_numbers<[1], [0], [0], [1], [0, 0, 1, 1], [], []>} : vector<8x64xbf16>, vector<64x128xbf16>, vector<8x128xf32> -> vector<8x128xf32>
    %c0_9 = arith.constant 0 : index
    %c0_10 = arith.constant 0 : index
    %12 = vector.load %arg5[%c0_9, %c0_10] : memref<1x128xf32, #tpu.memory_space<vmem>>, vector<1x128xf32>
    %13 = vector.broadcast %12 : vector<1x128xf32> to vector<8x128xf32>
    %14 = arith.addf %11, %13 : vector<8x128xf32>
    %cst_11 = arith.constant 0.000000e+00 : f32
    %15 = vector.broadcast %cst_11 : f32 to vector<8x128xf32>
    %16 = arith.maximumf %14, %15 : vector<8x128xf32>
    %17 = arith.truncf %16 : vector<8x128xf32> to vector<8x128xbf16>
    %c0_12 = arith.constant 0 : index
    %c0_13 = arith.constant 0 : index
    %18 = vector.load %arg6[%c0_12, %c0_13] : memref<128x256xbf16, #tpu.memory_space<vmem>>, vector<128x256xbf16>
    %cst_14 = arith.constant dense<0.000000e+00> : vector<8x256xf32>
    %19 = tpu.matmul %17, %18, %cst_14 {dimension_numbers = #tpu.dot_dimension_numbers<[1], [0], [0], [1], [0, 0, 1, 1], [], []>} : vector<8x128xbf16>, vector<128x256xbf16>, vector<8x256xf32> -> vector<8x256xf32>
    %c0_15 = arith.constant 0 : index
    %c0_16 = arith.constant 0 : index
    %20 = vector.load %arg7[%c0_15, %c0_16] : memref<1x256xf32, #tpu.memory_space<vmem>>, vector<1x256xf32>
    %21 = vector.broadcast %20 : vector<1x256xf32> to vector<8x256xf32>
    %22 = arith.addf %19, %21 : vector<8x256xf32>
    %cst_17 = arith.constant 0.000000e+00 : f32
    %23 = vector.broadcast %cst_17 : f32 to vector<8x256xf32>
    %24 = arith.maximumf %22, %23 : vector<8x256xf32>
    %25 = arith.truncf %24 : vector<8x256xf32> to vector<8x256xbf16>
    %c0_18 = arith.constant 0 : index
    %c0_19 = arith.constant 0 : index
    %26 = vector.load %arg8[%c0_18, %c0_19] : memref<256x128xbf16, #tpu.memory_space<vmem>>, vector<256x128xbf16>
    %cst_20 = arith.constant dense<0.000000e+00> : vector<8x128xf32>
    %27 = tpu.matmul %25, %26, %cst_20 {dimension_numbers = #tpu.dot_dimension_numbers<[1], [0], [0], [1], [0, 0, 1, 1], [], []>} : vector<8x256xbf16>, vector<256x128xbf16>, vector<8x128xf32> -> vector<8x128xf32>
    %c0_21 = arith.constant 0 : index
    %c0_22 = arith.constant 0 : index
    %28 = vector.load %arg9[%c0_21, %c0_22] : memref<1x128xf32, #tpu.memory_space<vmem>>, vector<1x128xf32>
    %29 = vector.broadcast %28 : vector<1x128xf32> to vector<8x128xf32>
    %30 = arith.addf %27, %29 : vector<8x128xf32>
    %cst_23 = arith.constant dense<0xFF800000> : vector<8xf32>
    %31 = vector.multi_reduction <maximumf>, %30, %cst_23 [1] : vector<8x128xf32> to vector<8xf32>
    %32 = vector.shape_cast %31 : vector<8xf32> to vector<8x1xf32>
    %33 = vector.broadcast %32 : vector<8x1xf32> to vector<8x128xf32>
    %34 = arith.subf %30, %33 : vector<8x128xf32>
    %35 = math.exp %34 : vector<8x128xf32>
    %cst_24 = arith.constant dense<0.000000e+00> : vector<8xf32>
    %36 = vector.multi_reduction <add>, %35, %cst_24 [1] : vector<8x128xf32> to vector<8xf32>
    %37 = vector.shape_cast %36 : vector<8xf32> to vector<8x1xf32>
    %38 = tpu.reciprocal %37 {approx = true} : vector<8x1xf32> -> vector<8x1xf32>
    %39 = vector.broadcast %38 : vector<8x1xf32> to vector<8x128xf32>
    %40 = arith.mulf %35, %39 : vector<8x128xf32>
    %c0_25 = arith.constant 0 : index
    %c0_26 = arith.constant 0 : index
    %41 = vector.load %arg10[%c0_25, %c0_26] : memref<8x128xf32, #tpu.memory_space<vmem>>, vector<8x128xf32>
    tpu.vector_store %arg10[%c0_25, %c0_26], %40 {strides = array<i32>} : memref<8x128xf32, #tpu.memory_space<vmem>>, vector<8x128xf32>,
    return
  }
  func.func @transform_0(%arg0: i32) -> (i32, i32) {
    %c0_i32 = arith.constant 0 : i32
    %c0_i32_0 = arith.constant 0 : i32
    return %arg0, %c0_i32 : i32, i32
  }
  func.func @transform_1(%arg0: i32) -> (i32, i32) {
    %c0_i32 = arith.constant 0 : i32
    %c0_i32_0 = arith.constant 0 : i32
    %c0_i32_1 = arith.constant 0 : i32
    return %c0_i32, %c0_i32_0 : i32, i32
  }
  func.func @transform_2(%arg0: i32) -> (i32, i32) {
    %c0_i32 = arith.constant 0 : i32
    %c0_i32_0 = arith.constant 0 : i32
    %c0_i32_1 = arith.constant 0 : i32
    return %c0_i32, %c0_i32_0 : i32, i32
  }
  func.func @transform_3(%arg0: i32) -> (i32, i32) {
    %c0_i32 = arith.constant 0 : i32
    %c0_i32_0 = arith.constant 0 : i32
    %c0_i32_1 = arith.constant 0 : i32
    return %c0_i32, %c0_i32_0 : i32, i32
  }
  func.func @transform_4(%arg0: i32) -> (i32, i32) {
    %c0_i32 = arith.constant 0 : i32
    %c0_i32_0 = arith.constant 0 : i32
    %c0_i32_1 = arith.constant 0 : i32
    return %c0_i32, %c0_i32_0 : i32, i32
  }
  func.func @transform_5(%arg0: i32) -> (i32, i32) {
    %c0_i32 = arith.constant 0 : i32
    %c0_i32_0 = arith.constant 0 : i32
    %c0_i32_1 = arith.constant 0 : i32
    return %c0_i32, %c0_i32_0 : i32, i32
  }
  func.func @transform_6(%arg0: i32) -> (i32, i32) {
    %c0_i32 = arith.constant 0 : i32
    %c0_i32_0 = arith.constant 0 : i32
    %c0_i32_1 = arith.constant 0 : i32
    return %c0_i32, %c0_i32_0 : i32, i32
  }
  func.func @transform_7(%arg0: i32) -> (i32, i32) {
    %c0_i32 = arith.constant 0 : i32
    %c0_i32_0 = arith.constant 0 : i32
    %c0_i32_1 = arith.constant 0 : i32
    return %c0_i32, %c0_i32_0 : i32, i32
  }
  func.func @transform_8(%arg0: i32) -> (i32, i32) {
    %c0_i32 = arith.constant 0 : i32
    %c0_i32_0 = arith.constant 0 : i32
    %c0_i32_1 = arith.constant 0 : i32
    return %c0_i32, %c0_i32_0 : i32, i32
  }
  func.func @transform_9(%arg0: i32) -> (i32, i32) {
    %c0_i32 = arith.constant 0 : i32
    %c0_i32_0 = arith.constant 0 : i32
    return %arg0, %c0_i32 : i32, i32
  }
}

</mosaic_0001>

<llo_original>
// kernel: decoder_forward.1
$region0: #{decoder_forward.1}
  #allocation0 [shape = 'u32[]', space=smem, size = 0x4, offset = 0x4, fixed_abs, tag = 'smem constant byte address 0x4 - core index']
  #allocation1 [shape = 'u32[144,128]{1,0:T(1,128)}', space=vmem, size = 0x12000, scoped, tag = 'internal scratch']
  %s0 = inlined_call_operand.hbm [shape: f32[8,10], index: 0, kind: input, shape index: {}]
  %s1 = inlined_call_operand.hbm [shape: bf16[10,64], index: 1, kind: input, shape index: {}]
  %s2 = inlined_call_operand.vmem [shape: f32[1,64], index: 2, kind: input, shape index: {}]
  %s3 = inlined_call_operand.hbm [shape: bf16[64,128], index: 3, kind: input, shape index: {}]
  %s4 = inlined_call_operand.vmem [shape: f32[1,128], index: 4, kind: input, shape index: {}]
  %s5 = inlined_call_operand.hbm [shape: bf16[128,256], index: 5, kind: input, shape index: {}]
  %s6 = inlined_call_operand.vmem [shape: f32[1,256], index: 6, kind: input, shape index: {}]
  %s7 = inlined_call_operand.hbm [shape: bf16[256,128], index: 7, kind: input, shape index: {}]
  %s8 = inlined_call_operand.vmem [shape: f32[1,128], index: 8, kind: input, shape index: {}]
  %s9 = inlined_call_operand.hbm [shape: f32[8,128], index: 9, kind: output, shape index: {}]
  %s10 = sld [smem:[#allocation0]]
  $region66: #{decoder_forward.1} parent=0
    _
  %s12 = ssub.s32 1, %s10
  %s13 = scalar_select 0, %s12, %s10
  $region1: #{decoder_forward.1} parent=0
    #allocation2 [shape = 'u8[4096]{0}', space=vmem, size = 0x1000, scoped, tag = 'input window, operand 0, single buffered']
    #allocation3 [shape = 's32[1]{0}', space=sflag, size = 0x4, scoped, tag = 'scoped memory for decoder_forward.1']
    #allocation4 [shape = 's32[1]{0}', space=sflag, size = 0x4, scoped, tag = 'scoped memory for decoder_forward.1']
    #allocation5 [shape = 'u8[4096]{0}', space=vmem, size = 0x1000, scoped, tag = 'input window, operand 1, single buffered']
    #allocation6 [shape = 's32[1]{0}', space=sflag, size = 0x4, scoped, tag = 'scoped memory for decoder_forward.1']
    #allocation7 [shape = 'u8[16384]{0}', space=vmem, size = 0x4000, scoped, tag = 'input window, operand 3, single buffered']
    #allocation8 [shape = 'u8[65536]{0}', space=vmem, size = 0x10000, scoped, tag = 'input window, operand 5, single buffered']
    #allocation9 [shape = 's32[1]{0}', space=sflag, size = 0x4, scoped, tag = 'scoped memory for decoder_forward.1']
    #allocation10 [shape = 'u8[65536]{0}', space=vmem, size = 0x10000, scoped, tag = 'input window, operand 7, single buffered']
    #allocation11 [shape = 'u8[4096]{0}', space=vmem, size = 0x1000, scoped, tag = 'output window, operand 0, single buffered']
    %14 = vsyncpa [#allocation3], 0
    %15 = vsyncpa [#allocation6], 0
    %16 = vsyncpa [#allocation9], 0
    %17 = vsyncpa [#allocation4], 0
    // Predicated region
    $region2: #{decoder_forward.1} parent=1 // pred_check
      _
    $region3: #{decoder_forward.1} parent=1 // pred_check_branch
      %19 = sbr.rel (0) target = $region5
    $region4: #{decoder_forward.1} parent=1 // pred_region
      %s21 = ssub.s32 128, 128
      %22 = vsyncadd [#allocation3], %s21
      %s24 = sshll.u32 [#allocation2], 4
      %s25 = int_to_ptr.vmem [resolvable:$true] %s24
      %27 = dma.hbm_to_vmem [thread:$0]  %s0, 128, %s25, [#allocation3]
    $region5: #{decoder_forward.1} parent=1 // pred_fallthru
      _
    // Predicated region
    $region6: #{decoder_forward.1} parent=1 // pred_check
      _
    $region7: #{decoder_forward.1} parent=1 // pred_check_branch
      %29 = sbr.rel (0) target = $region9
    $region8: #{decoder_forward.1} parent=1 // pred_region
      %s31 = ssub.s32 128, 128
      %32 = vsyncadd [#allocation6], %s31
      %s33 = sshll.u32 [#allocation5], 4
      %s34 = int_to_ptr.vmem [resolvable:$true] %s33
      %39 = dma.hbm_to_vmem [thread:$0]  %s1, 128, %s34, [#allocation6], 64, 64, 4
    $region9: #{decoder_forward.1} parent=1 // pred_fallthru
      _
    // Predicated region
    $region10: #{decoder_forward.1} parent=1 // pred_check
      _
    $region11: #{decoder_forward.1} parent=1 // pred_check_branch
      %41 = sbr.rel (0) target = $region13
    $region12: #{decoder_forward.1} parent=1 // pred_region
      _
    $region13: #{decoder_forward.1} parent=1 // pred_fallthru
      _
    // Predicated region
    $region14: #{decoder_forward.1} parent=1 // pred_check
      _
    $region15: #{decoder_forward.1} parent=1 // pred_check_branch
      %43 = sbr.rel (0) target = $region17
    $region16: #{decoder_forward.1} parent=1 // pred_region
      %s45 = ssub.s32 512, 512
      %46 = vsyncadd [#allocation6], %s45
      %s47 = sshll.u32 [#allocation7], 4
      %s48 = int_to_ptr.vmem [resolvable:$true] %s47
      %53 = dma.hbm_to_vmem [thread:$0]  %s3, 512, %s48, [#allocation6], 64, 64, 4
    $region17: #{decoder_forward.1} parent=1 // pred_fallthru
      _
    // Predicated region
    $region18: #{decoder_forward.1} parent=1 // pred_check
      _
    $region19: #{decoder_forward.1} parent=1 // pred_check_branch
      %55 = sbr.rel (0) target = $region21
    $region20: #{decoder_forward.1} parent=1 // pred_region
      _
    $region21: #{decoder_forward.1} parent=1 // pred_fallthru
      _
    // Predicated region
    $region22: #{decoder_forward.1} parent=1 // pred_check
      _
    $region23: #{decoder_forward.1} parent=1 // pred_check_branch
      %57 = sbr.rel (0) target = $region25
    $region24: #{decoder_forward.1} parent=1 // pred_region
      %s59 = ssub.s32 2048, 2048
      %60 = vsyncadd [#allocation9], %s59
      %s61 = sshll.u32 [#allocation8], 4
      %s62 = int_to_ptr.vmem [resolvable:$true] %s61
      %67 = dma.hbm_to_vmem [thread:$0]  %s5, 2048, %s62, [#allocation9], 128, 128, 8
    $region25: #{decoder_forward.1} parent=1 // pred_fallthru
      _
    // Predicated region
    $region26: #{decoder_forward.1} parent=1 // pred_check
      _
    $region27: #{decoder_forward.1} parent=1 // pred_check_branch
      %69 = sbr.rel (0) target = $region29
    $region28: #{decoder_forward.1} parent=1 // pred_region
      _
    $region29: #{decoder_forward.1} parent=1 // pred_fallthru
      _
    // Predicated region
    $region30: #{decoder_forward.1} parent=1 // pred_check
      _
    $region31: #{decoder_forward.1} parent=1 // pred_check_branch
      %71 = sbr.rel (0) target = $region33
    $region32: #{decoder_forward.1} parent=1 // pred_region
      %s73 = ssub.s32 2048, 2048
      %74 = vsyncadd [#allocation9], %s73
      %s75 = sshll.u32 [#allocation10], 4
      %s76 = int_to_ptr.vmem [resolvable:$true] %s75
      %81 = dma.hbm_to_vmem [thread:$0]  %s7, 2048, %s76, [#allocation9], 64, 64, 4
    $region33: #{decoder_forward.1} parent=1 // pred_fallthru
      _
    // Predicated region
    $region34: #{decoder_forward.1} parent=1 // pred_check
      _
    $region35: #{decoder_forward.1} parent=1 // pred_check_branch
      %83 = sbr.rel (0) target = $region37
    $region36: #{decoder_forward.1} parent=1 // pred_region
      _
    $region37: #{decoder_forward.1} parent=1 // pred_fallthru
      _
    // Predicated region
    $region38: #{decoder_forward.1} parent=1 // pred_check
      _
    $region39: #{decoder_forward.1} parent=1 // pred_check_branch
      %85 = sbr.rel (0) target = $region41
    $region40: #{decoder_forward.1} parent=1 // pred_region
      %86 = dma.done [#allocation3], 128
    $region41: #{decoder_forward.1} parent=1 // pred_fallthru
      _
    // Predicated region
    $region42: #{decoder_forward.1} parent=1 // pred_check
      _
    $region43: #{decoder_forward.1} parent=1 // pred_check_branch
      %88 = sbr.rel (0) target = $region45
    $region44: #{decoder_forward.1} parent=1 // pred_region
      %89 = dma.done [#allocation6], 128
    $region45: #{decoder_forward.1} parent=1 // pred_fallthru
      _
    // Predicated region
    $region46: #{decoder_forward.1} parent=1 // pred_check
      _
    $region47: #{decoder_forward.1} parent=1 // pred_check_branch
      %91 = sbr.rel (0) target = $region49
    $region48: #{decoder_forward.1} parent=1 // pred_region
      %92 = dma.done [#allocation6], 512
    $region49: #{decoder_forward.1} parent=1 // pred_fallthru
      _
    // Predicated region
    $region50: #{decoder_forward.1} parent=1 // pred_check
      _
    $region51: #{decoder_forward.1} parent=1 // pred_check_branch
      %94 = sbr.rel (0) target = $region53
    $region52: #{decoder_forward.1} parent=1 // pred_region
      %95 = dma.done [#allocation9], 2048
    $region53: #{decoder_forward.1} parent=1 // pred_fallthru
      _
    // Predicated region
    $region54: #{decoder_forward.1} parent=1 // pred_check
      _
    $region55: #{decoder_forward.1} parent=1 // pred_check_branch
      %97 = sbr.rel (0) target = $region57
    $region56: #{decoder_forward.1} parent=1 // pred_region
      %98 = dma.done [#allocation9], 2048
    $region57: #{decoder_forward.1} parent=1 // pred_fallthru
      _
    %v100 = vld [vmem:[#allocation2] sm:$0xff]
    %v101 = vpack.c.bf16 %v100, %v100
    %v102 = vld [vmem:[#allocation5] sm:$0xf]
    %v103 = vld [vmem:[#allocation5 + $0x4] sm:$0x1]
    %v104 = vld [vmem:[%s2] sm:$0x1]
    %v106 = vlaneseq
    %v107 = vshrl.u32 %v106, 7
    %v108 = vsub.s32 0, %v107
    %v109 = vrot.slane %v104, %v108
    %v113 = vunpack.c.l.b16 %v102
    %v114 = vunpack.c.l.b16 %v103
    %v115 = vpack.c.b16 %v114, %v113
    %vm116 = vcmask 80896
    %v118 = vsel %vm116, %v101, 0
    %vm120 = vcmask 1044480
    %v122 = vsel %vm120, %v115, 0
    %124 = vmatprep.subr.bf16.mxu0 0
    %125 = vmatpush1.bf16.msra.mxu0 %v122
    %126 = vmatprep.subr.bf16.mxu0 0
    %127 = vmatpush1.bf16.msra.mxu0 0
    %128 = vmatprep.subr.bf16.mxu0 0
    %129 = vmatpush1.bf16.msra.mxu0 0
    %130 = vmatprep.subr.bf16.mxu0 0
    %131 = vmatpush1.bf16.msra.mxu0 0
    %132 = vmatprep.subr.bf16.mxu0 0
    %133 = vmatpush1.bf16.msra.mxu0 0
    %134 = vmatprep.subr.bf16.mxu0 0
    %135 = vmatpush1.bf16.msra.mxu0 0
    %136 = vmatprep.subr.bf16.mxu0 0
    %137 = vmatpush1.bf16.msra.mxu0 0
    %138 = vmatprep.subr.bf16.mxu0 0
    %139 = vmatpush1.bf16.msra.mxu0 0
    %140 = vmatprep.subr.bf16.mxu0 0
    %141 = vmatpush1.bf16.msra.mxu0 0
    %142 = vmatprep.subr.bf16.mxu0 0
    %143 = vmatpush1.bf16.msra.mxu0 0
    %144 = vmatprep.subr.bf16.mxu0 0
    %145 = vmatpush1.bf16.msra.mxu0 0
    %146 = vmatprep.subr.bf16.mxu0 0
    %147 = vmatpush1.bf16.msra.mxu0 0
    %148 = vmatprep.subr.bf16.mxu0 0
    %149 = vmatpush1.bf16.msra.mxu0 0
    %150 = vmatprep.subr.bf16.mxu0 0
    %151 = vmatpush1.bf16.msra.mxu0 0
    %152 = vmatprep.subr.bf16.mxu0 0
    %153 = vmatpush1.bf16.msra.mxu0 0
    %154 = vmatprep.subr.bf16.mxu0 0
    %155 = vmatpush1.bf16.msra.mxu0 0
    %156 = vmatprep.mubr.bf16.mxu0 0
    %157 = vmatmul.mubr.bf16.gmra.mrb[0].mxu0 %v118
    %v158 = vpop.f32.mrb[0].mxu0
    %v159 = vadd.f32 %v109, %v158
    %v160 = vpop.f32.mrb[0].mxu0
    %v161 = vpop.f32.mrb[0].mxu0
    %v162 = vpop.f32.mrb[0].mxu0
    %163 = vdwg.mxu0
    %v164 = vmax.f32 %v159, 0.0
    %v165 = vpack.c.bf16 %v164, %v164
    %v166 = vld [vmem:[#allocation7] sm:$0xf]
    %v167 = vld [vmem:[#allocation7 + $0x4] sm:$0xf]
    %v168 = vld [vmem:[#allocation7 + $0x8] sm:$0xf]
    %v169 = vld [vmem:[#allocation7 + $0xc] sm:$0xf]
    %v170 = vld [vmem:[#allocation7 + $0x10] sm:$0xf]
    %v171 = vld [vmem:[#allocation7 + $0x14] sm:$0xf]
    %v172 = vld [vmem:[#allocation7 + $0x18] sm:$0xf]
    %v173 = vld [vmem:[#allocation7 + $0x1c] sm:$0xf]
    %v174 = vld [vmem:[%s4] sm:$0x1]
    %v176 = vlaneseq
    %v177 = vshrl.u32 %v176, 7
    %v178 = vsub.s32 0, %v177
    %v179 = vrot.slane %v174, %v178
    %v189 = vunpack.c.l.b16 %v166
    %v190 = vunpack.c.l.b16 %v167
    %v191 = vunpack.c.l.b16 %v168
    %v192 = vunpack.c.l.b16 %v169
    %v193 = vunpack.c.l.b16 %v170
    %v194 = vunpack.c.l.b16 %v171
    %v195 = vunpack.c.l.b16 %v172
    %v196 = vunpack.c.l.b16 %v173
    %v197 = vpack.c.b16 %v190, %v189
    %v198 = vpack.c.b16 %v192, %v191
    %v199 = vpack.c.b16 %v194, %v193
    %v200 = vpack.c.b16 %v196, %v195
    %vm205 = vcmask 523264
    %v207 = vsel %vm205, %v165, 0
    %209 = vmatprep.subr.bf16.mxu0 0
    %210 = vmatpush1.bf16.msra.mxu0 %v197
    %211 = vmatprep.subr.bf16.mxu0 0
    %212 = vmatpush1.bf16.msra.mxu0 %v198
    %213 = vmatprep.subr.bf16.mxu0 0
    %214 = vmatpush1.bf16.msra.mxu0 %v199
    %215 = vmatprep.subr.bf16.mxu0 0
    %216 = vmatpush1.bf16.msra.mxu0 %v200
    %217 = vmatprep.subr.bf16.mxu0 0
    %218 = vmatpush1.bf16.msra.mxu0 0
    %219 = vmatprep.subr.bf16.mxu0 0
    %220 = vmatpush1.bf16.msra.mxu0 0
    %221 = vmatprep.subr.bf16.mxu0 0
    %222 = vmatpush1.bf16.msra.mxu0 0
    %223 = vmatprep.subr.bf16.mxu0 0
    %224 = vmatpush1.bf16.msra.mxu0 0
    %225 = vmatprep.subr.bf16.mxu0 0
    %226 = vmatpush1.bf16.msra.mxu0 0
    %227 = vmatprep.subr.bf16.mxu0 0
    %228 = vmatpush1.bf16.msra.mxu0 0
    %229 = vmatprep.subr.bf16.mxu0 0
    %230 = vmatpush1.bf16.msra.mxu0 0
    %231 = vmatprep.subr.bf16.mxu0 0
    %232 = vmatpush1.bf16.msra.mxu0 0
    %233 = vmatprep.subr.bf16.mxu0 0
    %234 = vmatpush1.bf16.msra.mxu0 0
    %235 = vmatprep.subr.bf16.mxu0 0
    %236 = vmatpush1.bf16.msra.mxu0 0
    %237 = vmatprep.subr.bf16.mxu0 0
    %238 = vmatpush1.bf16.msra.mxu0 0
    %239 = vmatprep.subr.bf16.mxu0 0
    %240 = vmatpush1.bf16.msra.mxu0 0
    %241 = vmatprep.mubr.bf16.mxu0 0
    %242 = vmatmul.mubr.bf16.gmra.mrb[0].mxu0 %v207
    %v243 = vpop.f32.mrb[0].mxu0
    %v244 = vadd.f32 %v179, %v243
    %v245 = vpop.f32.mrb[0].mxu0
    %v246 = vpop.f32.mrb[0].mxu0
    %v247 = vpop.f32.mrb[0].mxu0
    %248 = vdwg.mxu0
    %v249 = vmax.f32 %v244, 0.0
    %v250 = vpack.c.bf16 %v249, %v249
    %v251 = vld [vmem:[#allocation8] sm:$0xff]
    %v252 = vld [vmem:[#allocation8 + $0x8] sm:$0xff]
    %v253 = vld [vmem:[#allocation8 + $0x10] sm:$0xff]
    %v254 = vld [vmem:[#allocation8 + $0x18] sm:$0xff]
    %v255 = vld [vmem:[#allocation8 + $0x20] sm:$0xff]
    %v256 = vld [vmem:[#allocation8 + $0x28] sm:$0xff]
    %v257 = vld [vmem:[#allocation8 + $0x30] sm:$0xff]
    %v258 = vld [vmem:[#allocation8 + $0x38] sm:$0xff]
    %v259 = vld [vmem:[#allocation8 + $0x40] sm:$0xff]
    %v260 = vld [vmem:[#allocation8 + $0x48] sm:$0xff]
    %v261 = vld [vmem:[#allocation8 + $0x50] sm:$0xff]
    %v262 = vld [vmem:[#allocation8 + $0x58] sm:$0xff]
    %v263 = vld [vmem:[#allocation8 + $0x60] sm:$0xff]
    %v264 = vld [vmem:[#allocation8 + $0x68] sm:$0xff]
    %v265 = vld [vmem:[#allocation8 + $0x70] sm:$0xff]
    %v266 = vld [vmem:[#allocation8 + $0x78] sm:$0xff]
    %v267 = vld [vmem:[%s6] sm:$0x3]
    %v269 = vlaneseq
    %v270 = vshrl.u32 %v269, 7
    %v271 = vsub.s32 0, %v270
    %v272 = vrot.slane %v267, %v271
    %v273 = vlaneseq
    %v274 = vshrl.u32 %v273, 7
    %v275 = vsub.s32 1, %v274
    %v276 = vrot.slane %v267, %v275
    %v295 = vunpack.c.l.b16 %v251
    %v296 = vunpack.c.h.b16 %v251
    %v297 = vunpack.c.l.b16 %v252
    %v298 = vunpack.c.h.b16 %v252
    %v299 = vunpack.c.l.b16 %v253
    %v300 = vunpack.c.h.b16 %v253
    %v301 = vunpack.c.l.b16 %v254
    %v302 = vunpack.c.h.b16 %v254
    %v303 = vunpack.c.l.b16 %v255
    %v304 = vunpack.c.h.b16 %v255
    %v305 = vunpack.c.l.b16 %v256
    %v306 = vunpack.c.h.b16 %v256
    %v307 = vunpack.c.l.b16 %v257
    %v308 = vunpack.c.h.b16 %v257
    %v309 = vunpack.c.l.b16 %v258
    %v310 = vunpack.c.h.b16 %v258
    %v311 = vunpack.c.l.b16 %v259
    %v312 = vunpack.c.h.b16 %v259
    %v313 = vunpack.c.l.b16 %v260
    %v314 = vunpack.c.h.b16 %v260
    %v315 = vunpack.c.l.b16 %v261
    %v316 = vunpack.c.h.b16 %v261
    %v317 = vunpack.c.l.b16 %v262
    %v318 = vunpack.c.h.b16 %v262
    %v319 = vunpack.c.l.b16 %v263
    %v320 = vunpack.c.h.b16 %v263
    %v321 = vunpack.c.l.b16 %v264
    %v322 = vunpack.c.h.b16 %v264
    %v323 = vunpack.c.l.b16 %v265
    %v324 = vunpack.c.h.b16 %v265
    %v325 = vunpack.c.l.b16 %v266
    %v326 = vunpack.c.h.b16 %v266
    %v327 = vpack.c.b16 %v297, %v295
    %v328 = vpack.c.b16 %v298, %v296
    %v329 = vpack.c.b16 %v301, %v299
    %v330 = vpack.c.b16 %v302, %v300
    %v331 = vpack.c.b16 %v305, %v303
    %v332 = vpack.c.b16 %v306, %v304
    %v333 = vpack.c.b16 %v309, %v307
    %v334 = vpack.c.b16 %v310, %v308
    %v335 = vpack.c.b16 %v313, %v311
    %v336 = vpack.c.b16 %v314, %v312
    %v337 = vpack.c.b16 %v317, %v315
    %v338 = vpack.c.b16 %v318, %v316
    %v339 = vpack.c.b16 %v321, %v319
    %v340 = vpack.c.b16 %v322, %v320
    %v341 = vpack.c.b16 %v325, %v323
    %v342 = vpack.c.b16 %v326, %v324
    %359 = vmatprep.subr.bf16.mxu0 %v328
    %360 = vmatpush1.bf16.msra.mxu0 %v327
    %361 = vmatprep.subr.bf16.mxu0 %v330
    %362 = vmatpush1.bf16.msra.mxu0 %v329
    %363 = vmatprep.subr.bf16.mxu0 %v332
    %364 = vmatpush1.bf16.msra.mxu0 %v331
    %365 = vmatprep.subr.bf16.mxu0 %v334
    %366 = vmatpush1.bf16.msra.mxu0 %v333
    %367 = vmatprep.subr.bf16.mxu0 %v336
    %368 = vmatpush1.bf16.msra.mxu0 %v335
    %369 = vmatprep.subr.bf16.mxu0 %v338
    %370 = vmatpush1.bf16.msra.mxu0 %v337
    %371 = vmatprep.subr.bf16.mxu0 %v340
    %372 = vmatpush1.bf16.msra.mxu0 %v339
    %373 = vmatprep.subr.bf16.mxu0 %v342
    %374 = vmatpush1.bf16.msra.mxu0 %v341
    %375 = vmatprep.subr.bf16.mxu0 0
    %376 = vmatpush1.bf16.msra.mxu0 0
    %377 = vmatprep.subr.bf16.mxu0 0
    %378 = vmatpush1.bf16.msra.mxu0 0
    %379 = vmatprep.subr.bf16.mxu0 0
    %380 = vmatpush1.bf16.msra.mxu0 0
    %381 = vmatprep.subr.bf16.mxu0 0
    %382 = vmatpush1.bf16.msra.mxu0 0
    %383 = vmatprep.subr.bf16.mxu0 0
    %384 = vmatpush1.bf16.msra.mxu0 0
    %385 = vmatprep.subr.bf16.mxu0 0
    %386 = vmatpush1.bf16.msra.mxu0 0
    %387 = vmatprep.subr.bf16.mxu0 0
    %388 = vmatpush1.bf16.msra.mxu0 0
    %389 = vmatprep.subr.bf16.mxu0 0
    %390 = vmatpush1.bf16.msra.mxu0 0
    %391 = vmatprep.mubr.bf16.mxu0 0
    %392 = vmatmul.mubr.bf16.gmra.mrb[0].mxu0 %v250
    %v393 = vpop.f32.mrb[0].mxu0
    %v394 = vadd.f32 %v272, %v393
    %v395 = vpop.f32.mrb[0].mxu0
    %v396 = vadd.f32 %v276, %v395
    %v397 = vpop.f32.mrb[0].mxu0
    %v398 = vpop.f32.mrb[0].mxu0
    %399 = vdwg.mxu0
    %v400 = vmax.f32 %v394, 0.0
    %v401 = vmax.f32 %v396, 0.0
    %v402 = vpack.c.bf16 %v400, %v400
    %v403 = vpack.c.bf16 %v401, %v401
    %v404 = vld [vmem:[#allocation10] sm:$0xf]
    %v405 = vld [vmem:[#allocation10 + $0x4] sm:$0xf]
    %v406 = vld [vmem:[#allocation10 + $0x8] sm:$0xf]
    %v407 = vld [vmem:[#allocation10 + $0xc] sm:$0xf]
    %v408 = vld [vmem:[#allocation10 + $0x10] sm:$0xf]
    %v409 = vld [vmem:[#allocation10 + $0x14] sm:$0xf]
    %v410 = vld [vmem:[#allocation10 + $0x18] sm:$0xf]
    %v411 = vld [vmem:[#allocation10 + $0x1c] sm:$0xf]
    %v412 = vld [vmem:[#allocation10 + $0x20] sm:$0xf]
    %v413 = vld [vmem:[#allocation10 + $0x24] sm:$0xf]
    %v414 = vld [vmem:[#allocation10 + $0x28] sm:$0xf]
    %v415 = vld [vmem:[#allocation10 + $0x2c] sm:$0xf]
    %v416 = vld [vmem:[#allocation10 + $0x30] sm:$0xf]
    %v417 = vld [vmem:[#allocation10 + $0x34] sm:$0xf]
    %v418 = vld [vmem:[#allocation10 + $0x38] sm:$0xf]
    %v419 = vld [vmem:[#allocation10 + $0x3c] sm:$0xf]
    %v420 = vld [vmem:[#allocation10 + $0x40] sm:$0xf]
    %v421 = vld [vmem:[#allocation10 + $0x44] sm:$0xf]
    %v422 = vld [vmem:[#allocation10 + $0x48] sm:$0xf]
    %v423 = vld [vmem:[#allocation10 + $0x4c] sm:$0xf]
    %v424 = vld [vmem:[#allocation10 + $0x50] sm:$0xf]
    %v425 = vld [vmem:[#allocation10 + $0x54] sm:$0xf]
    %v426 = vld [vmem:[#allocation10 + $0x58] sm:$0xf]
    %v427 = vld [vmem:[#allocation10 + $0x5c] sm:$0xf]
    %v428 = vld [vmem:[#allocation10 + $0x60] sm:$0xf]
    %v429 = vld [vmem:[#allocation10 + $0x64] sm:$0xf]
    %v430 = vld [vmem:[#allocation10 + $0x68] sm:$0xf]
    %v431 = vld [vmem:[#allocation10 + $0x6c] sm:$0xf]
    %v432 = vld [vmem:[#allocation10 + $0x70] sm:$0xf]
    %v433 = vld [vmem:[#allocation10 + $0x74] sm:$0xf]
    %v434 = vld [vmem:[#allocation10 + $0x78] sm:$0xf]
    %v435 = vld [vmem:[#allocation10 + $0x7c] sm:$0xf]
    %v436 = vld [vmem:[%s8] sm:$0x1]
    %v438 = vlaneseq
    %v439 = vshrl.u32 %v438, 7
    %v440 = vsub.s32 0, %v439
    %v441 = vrot.slane %v436, %v440
    %v475 = vunpack.c.l.b16 %v404
    %v476 = vunpack.c.l.b16 %v405
    %v477 = vunpack.c.l.b16 %v406
    %v478 = vunpack.c.l.b16 %v407
    %v479 = vunpack.c.l.b16 %v408
    %v480 = vunpack.c.l.b16 %v409
    %v481 = vunpack.c.l.b16 %v410
    %v482 = vunpack.c.l.b16 %v411
    %v483 = vunpack.c.l.b16 %v412
    %v484 = vunpack.c.l.b16 %v413
    %v485 = vunpack.c.l.b16 %v414
    %v486 = vunpack.c.l.b16 %v415
    %v487 = vunpack.c.l.b16 %v416
    %v488 = vunpack.c.l.b16 %v417
    %v489 = vunpack.c.l.b16 %v418
    %v490 = vunpack.c.l.b16 %v419
    %v491 = vunpack.c.l.b16 %v420
    %v492 = vunpack.c.l.b16 %v421
    %v493 = vunpack.c.l.b16 %v422
    %v494 = vunpack.c.l.b16 %v423
    %v495 = vunpack.c.l.b16 %v424
    %v496 = vunpack.c.l.b16 %v425
    %v497 = vunpack.c.l.b16 %v426
    %v498 = vunpack.c.l.b16 %v427
    %v499 = vunpack.c.l.b16 %v428
    %v500 = vunpack.c.l.b16 %v429
    %v501 = vunpack.c.l.b16 %v430
    %v502 = vunpack.c.l.b16 %v431
    %v503 = vunpack.c.l.b16 %v432
    %v504 = vunpack.c.l.b16 %v433
    %v505 = vunpack.c.l.b16 %v434
    %v506 = vunpack.c.l.b16 %v435
    %v507 = vpack.c.b16 %v476, %v475
    %v508 = vpack.c.b16 %v478, %v477
    %v509 = vpack.c.b16 %v480, %v479
    %v510 = vpack.c.b16 %v482, %v481
    %v511 = vpack.c.b16 %v484, %v483
    %v512 = vpack.c.b16 %v486, %v485
    %v513 = vpack.c.b16 %v488, %v487
    %v514 = vpack.c.b16 %v490, %v489
    %v515 = vpack.c.b16 %v492, %v491
    %v516 = vpack.c.b16 %v494, %v493
    %v517 = vpack.c.b16 %v496, %v495
    %v518 = vpack.c.b16 %v498, %v497
    %v519 = vpack.c.b16 %v500, %v499
    %v520 = vpack.c.b16 %v502, %v501
    %v521 = vpack.c.b16 %v504, %v503
    %v522 = vpack.c.b16 %v506, %v505
    %539 = vmatprep.subr.bf16.mxu0 0
    %540 = vmatpush1.bf16.msra.mxu0 %v507
    %541 = vmatprep.subr.bf16.mxu0 0
    %542 = vmatpush1.bf16.msra.mxu0 %v508
    %543 = vmatprep.subr.bf16.mxu0 0
    %544 = vmatpush1.bf16.msra.mxu0 %v509
    %545 = vmatprep.subr.bf16.mxu0 0
    %546 = vmatpush1.bf16.msra.mxu0 %v510
    %547 = vmatprep.subr.bf16.mxu0 0
    %548 = vmatpush1.bf16.msra.mxu0 %v511
    %549 = vmatprep.subr.bf16.mxu0 0
    %550 = vmatpush1.bf16.msra.mxu0 %v512
    %551 = vmatprep.subr.bf16.mxu0 0
    %552 = vmatpush1.bf16.msra.mxu0 %v513
    %553 = vmatprep.subr.bf16.mxu0 0
    %554 = vmatpush1.bf16.msra.mxu0 %v514
    %555 = vmatprep.subr.bf16.mxu0 0
    %556 = vmatpush1.bf16.msra.mxu0 %v515
    %557 = vmatprep.subr.bf16.mxu0 0
    %558 = vmatpush1.bf16.msra.mxu0 %v516
    %559 = vmatprep.subr.bf16.mxu0 0
    %560 = vmatpush1.bf16.msra.mxu0 %v517
    %561 = vmatprep.subr.bf16.mxu0 0
    %562 = vmatpush1.bf16.msra.mxu0 %v518
    %563 = vmatprep.subr.bf16.mxu0 0
    %564 = vmatpush1.bf16.msra.mxu0 %v519
    %565 = vmatprep.subr.bf16.mxu0 0
    %566 = vmatpush1.bf16.msra.mxu0 %v520
    %567 = vmatprep.subr.bf16.mxu0 0
    %568 = vmatpush1.bf16.msra.mxu0 %v521
    %569 = vmatprep.subr.bf16.mxu0 0
    %570 = vmatpush1.bf16.msra.mxu0 %v522
    %571 = vmatprep.mubr.bf16.mxu0 %v403
    %572 = vmatmul.mubr.bf16.gmra.mrb[0].mxu0 %v402
    %v573 = vpop.f32.mrb[0].mxu0
    %v574 = vadd.f32 %v441, %v573
    %v575 = vpop.f32.mrb[0].mxu0
    %v576 = vpop.f32.mrb[0].mxu0
    %v577 = vpop.f32.mrb[0].mxu0
    %578 = vdwg.mxu0
    %579 = vmax.xlane.f32.xlu0 %v574
    %v580 = vpop.xlane.xlu0 %579
    %v581 = vsub.f32 %v574, %v580
    %v582 = vmul.f32 %v581, 1.442695
    %v583 = vpow.pop %v582
    %584 = vadd.xlane.f32.xlu0 %v583
    %v585 = vpop.xlane.xlu0 %584
    %v586 = vrcp.pop %v585
    %v587 = vmul.f32 %v583, %v586
    %588 = vst [vmem:[#allocation11] sm:$0xff] %v587
    // Predicated region
    $region58: #{decoder_forward.1} parent=1 // pred_check
      _
    $region59: #{decoder_forward.1} parent=1 // pred_check_branch
      %590 = sbr.rel (0) target = $region61
    $region60: #{decoder_forward.1} parent=1 // pred_region
      %s592 = ssub.s32 128, 128
      %593 = vsyncadd [#allocation4], %s592
      %s595 = sshll.u32 [#allocation11], 4
      %s596 = int_to_ptr.vmem [resolvable:$true] %s595
      %598 = dma.vmem_to_hbm [thread:$0]  %s596, 128, %s9, [#allocation4]
    $region61: #{decoder_forward.1} parent=1 // pred_fallthru
      _
    // Predicated region
    $region62: #{decoder_forward.1} parent=1 // pred_check
      _
    $region63: #{decoder_forward.1} parent=1 // pred_check_branch
      %600 = sbr.rel (0) target = $region65
    $region64: #{decoder_forward.1} parent=1 // pred_region
      %601 = dma.done [#allocation4], 128
    $region65: #{decoder_forward.1} parent=1 // pred_fallthru
      _
    %602 = vsyncpa [#allocation3], 1
    %603 = vsyncpa [#allocation6], 1
    %604 = vsyncpa [#allocation9], 1
    %605 = vsyncpa [#allocation4], 1

</llo_original>
